<compile_context>
chip_gen: v7x
topology: tpu7x:2x2x1
jax: 0.10.0
libtpu: 0.0.40
codegen_flags: <defaults>
</compile_context>

<pallas_src>
import math

import jax
import jax.numpy as jnp
from jax.experimental import pallas as pl
from jax.experimental.pallas import tpu as pltpu


def _round_up(x, m):
    return (x + m - 1) // m * m


def _divisor_tile(n, t, quantum):
    """Largest of {t, t/2, t/4, ...} (multiples of `quantum`) that divides n, else t."""
    c = t
    while c >= quantum and c % quantum == 0:
        if n % c == 0:
            return c
        c //= 2
    return t


def _choose_tiles(n, tm, tk):
    n128 = _round_up(n, 128)
    tm = _round_up(max(8, min(tm, n128)), 8)
    tk = _round_up(max(128, min(tk, n128)), 128)
    # Keep >= 2 row tiles so the "parallel" axis can feed both TensorCores (v7x).
    while n128 // tm < 2 and tm > 256:
        tm //= 2
    tm = _round_up(tm, 8)
    # Prefer tiles that divide N exactly -> no padded copy of adj is needed.
    tm = _divisor_tile(n, tm, 8)
    tk = _divisor_tile(n, tk, 128)
    return tm, tk


def _make_gcn_kernel(support_resident, tk):
    def kernel(sup_ref, adj_ref, o_ref, acc_ref):
        k = pl.program_id(1)

        @pl.when(k == 0)
        def _init():
            acc_ref[...] = jnp.zeros_like(acc_ref)

        if support_resident:
            # Whole support lives in VMEM; slice the rows for this k tile.
            start = pl.multiple_of(k * tk, tk)
            sup = sup_ref[pl.ds(start, tk), :]
        else:
            sup = sup_ref[...]

        # adj is streamed in its native dtype; cast to bf16 right before the MXU
        # dot (the kernel is HBM-bound, the VPU cast is hidden under the DMA).
        acc_ref[...] += jnp.dot(
            adj_ref[...].astype(sup.dtype), sup,
            preferred_element_type=jnp.float32,
        )

        @pl.when(k == pl.num_programs(1) - 1)
        def _finalize():
            o_ref[...] = acc_ref[...].astype(o_ref.dtype)

    return kernel


def gcn_layer(x, weight, adj, *, tm=512, tk=1024):
    """Pallas GCN layer: adj @ (x @ weight). bias/batch_norm disabled (module defaults)."""
    # TODO(synk): bias=True and batch_norm=True paths not implemented — module defaults are off.
    n, f_in = x.shape
    f_out = weight.shape[1]
    out_dtype = x.dtype

    f_out_p = _round_up(f_out, 128)
    tm, tk = _choose_tiles(n, tm, tk)
    n_m = _round_up(n, tm)  # padded rows of adj / output
    n_k = _round_up(n, tk)  # padded cols of adj / rows of support
    grid_m = n_m // tm
    grid_k = n_k // tk

    # Hoisted: support = x @ W computed once by XLA (tiny GEMM), then cast to bf16.
    support = jnp.dot(x, weight, preferred_element_type=jnp.float32)
    if (n_k, f_out_p) == (n, f_out):
        sup_p = support.astype(jnp.bfloat16)
    else:
        sup_p = jnp.zeros((n_k, f_out_p), jnp.bfloat16).at[:n, :f_out].set(
            support.astype(jnp.bfloat16))

    # adj: only materialize a padded (bf16) copy when the tiles don't divide N.
    if (n_m, n_k) == adj.shape:
        adj_in = adj                       # zero-copy: cast happens inside the kernel
    else:
        adj_in = jnp.zeros((n_m, n_k), jnp.bfloat16).at[:n, :n].set(
            adj.astype(jnp.bfloat16))

    # Keep support fully VMEM-resident (DMA'd once) when it is small enough.
    support_resident = n_k * f_out_p * 2 <= 4 * 1024 * 1024
    if support_resident:
        sup_spec = pl.BlockSpec((n_k, f_out_p), lambda i, k: (0, 0))
    else:
        sup_spec = pl.BlockSpec((tk, f_out_p), lambda i, k: (k, 0))

    adj_bytes = n_m * n_k * jnp.dtype(adj_in.dtype).itemsize
    sup_bytes = n_k * f_out_p * 2 * (1 if support_resident else grid_m)
    out_bytes = n_m * f_out_p * jnp.dtype(out_dtype).itemsize
    cost = pl.CostEstimate(
        flops=2 * n_m * n_k * f_out_p,
        transcendentals=0,
        bytes_accessed=adj_bytes + sup_bytes + out_bytes,
    )

    out_p = pl.pallas_call(
        _make_gcn_kernel(support_resident, tk),
        out_shape=jax.ShapeDtypeStruct((n_m, f_out_p), out_dtype),
        grid_spec=pltpu.PrefetchScalarGridSpec(
            num_scalar_prefetch=0,
            grid=(grid_m, grid_k),
            in_specs=[
                sup_spec,                                      # support (resident or tiled)
                pl.BlockSpec((tm, tk), lambda i, k: (i, k)),   # adj tile, read exactly once
            ],
            out_specs=pl.BlockSpec((tm, f_out_p), lambda i, k: (i, 0)),
            scratch_shapes=[pltpu.VMEM((tm, f_out_p), jnp.float32)],
        ),
        compiler_params=pltpu.CompilerParams(
            dimension_semantics=("parallel", "arbitrary"),
            vmem_limit_bytes=32 * 1024 * 1024,
        ),
        cost_estimate=cost,
    )(sup_p, adj_in)

    return out_p[:n, :f_out]


def xavier_uniform(key, shape, dtype=jnp.float32):
    fan_in, fan_out = shape
    bound = math.sqrt(6.0 / (fan_in + fan_out))
    return jax.random.uniform(key, shape, dtype=dtype, minval=-bound, maxval=bound)


def _make_inputs(key, n, f_in, f_out):
    k_x, k_w, k_a = jax.random.split(key, 3)
    x = jax.random.normal(k_x, (n, f_in), dtype=jnp.float32)
    w = xavier_uniform(k_w, (f_in, f_out))
    # Symmetric, row-normalized dense adjacency (normalize in f32).
    a_raw = (jax.random.uniform(k_a, (n, n)) > 0.5).astype(jnp.float32)
    adj = a_raw + a_raw.T + jnp.eye(n, dtype=jnp.float32)
    adj = adj / jnp.sum(adj, axis=-1, keepdims=True)
    return x, w, adj


if __name__ == "__main__":
    key = jax.random.PRNGKey(0)
    k1, k2 = jax.random.split(key)

    # Case 1: tile-divisible N=512 -> zero-copy adj path, default tiles (tm
    # shrinks to 256 so grid_m=2 keeps both TensorCores busy), grid (2, 1).
    x, w, adj = _make_inputs(k1, 512, 96, 64)
    ref = adj @ (x @ w)
    out = jax.block_until_ready(gcn_layer(x, w, adj))
    assert out.shape == (512, 64)
    err = float(jnp.max(jnp.abs(out - ref)))
    assert jnp.allclose(out, ref, atol=2e-2, rtol=2e-2), f"case1 mismatch (max |err|={err})"

    # Case 2: small tiles -> 4x4 grid, exercises the k-axis accumulator init/finalize.
    out2 = jax.block_until_ready(gcn_layer(x, w, adj, tm=128, tk=128))
    err2 = float(jnp.max(jnp.abs(out2 - ref)))
    assert jnp.allclose(out2, ref, atol=2e-2, rtol=2e-2), f"case2 mismatch (max |err|={err2})"

    # Case 3: ragged N=300 -> exercises the padded-adj fallback path.
    x3, w3, adj3 = _make_inputs(k2, 300, 40, 96)
    ref3 = adj3 @ (x3 @ w3)
    out3 = jax.block_until_ready(gcn_layer(x3, w3, adj3))
    assert out3.shape == (300, 96)
    err3 = float(jnp.max(jnp.abs(out3 - ref3)))
    assert jnp.allclose(out3, ref3, atol=2e-2, rtol=2e-2), f"case3 mismatch (max |err|={err3})"

    print("KERNEL_OK")
</pallas_src>

<mosaic_0001>
module attributes {stable_mosaic.version = 11 : i64} {
  func.func @kernel(%arg0: i32, %arg1: i32, %arg2: memref<512x128xbf16, #tpu.memory_space<vmem>>, %arg3: memref<256x512xf32, #tpu.memory_space<vmem>>, %arg4: memref<256x128xf32, #tpu.memory_space<vmem>>, %arg5: memref<256x128xf32, #tpu.memory_space<vmem>>) attributes {dimension_semantics = [#tpu.dimension_semantics<parallel>, #tpu.dimension_semantics<arbitrary>], iteration_bounds = array<i64: 2, 1>, scalar_prefetch = 0 : i64, scratch_operands = 1 : i64, tpu.core_type = #tpu.core_type<tc>, window_params = [{pipeline_mode = #tpu.pipeline_mode<synchronous>, transform_indices = @transform_0, window_bounds = array<i64: 512, 128>}, {transform_indices = @transform_1, window_bounds = array<i64: 256, 512>}, {transform_indices = @transform_2, window_bounds = array<i64: 256, 128>}]} {
    %c0_i32 = arith.constant 0 : i32
    %0 = arith.cmpi eq, %arg1, %c0_i32 : i32
    %1 = arith.extui %0 : i1 to i32
    %c0_i32_0 = arith.constant 0 : i32
    %2 = arith.cmpi ne, %1, %c0_i32_0 : i32
    scf.if %2 {
      %cst_9 = arith.constant 0.000000e+00 : f32
      %16 = vector.broadcast %cst_9 : f32 to vector<256x128xf32>
      %c0_10 = arith.constant 0 : index
      %c0_11 = arith.constant 0 : index
      %17 = vector.load %arg5[%c0_10, %c0_11] : memref<256x128xf32, #tpu.memory_space<vmem>>, vector<256x128xf32>
      tpu.vector_store %arg5[%c0_10, %c0_11], %16 {strides = array<i32>} : memref<256x128xf32, #tpu.memory_space<vmem>>, vector<256x128xf32>,
    } else {
    }
    %c512_i32 = arith.constant 512 : i32
    %3 = arith.muli %arg1, %c512_i32 : i32
    %4 = tpu.assume_multiple %3, 512 : i32
    %5 = arith.index_cast %4 : i32 to index
    %c0 = arith.constant 0 : index
    %6 = vector.load %arg2[%5, %c0] : memref<512x128xbf16, #tpu.memory_space<vmem>>, vector<512x128xbf16>
    %c0_1 = arith.constant 0 : index
    %c0_2 = arith.constant 0 : index
    %7 = vector.load %arg5[%c0_1, %c0_2] : memref<256x128xf32, #tpu.memory_space<vmem>>, vector<256x128xf32>
    %c0_3 = arith.constant 0 : index
    %c0_4 = arith.constant 0 : index
    %8 = vector.load %arg3[%c0_3, %c0_4] : memref<256x512xf32, #tpu.memory_space<vmem>>, vector<256x512xf32>
    %9 = arith.truncf %8 : vector<256x512xf32> to vector<256x512xbf16>
    %cst = arith.constant dense<0.000000e+00> : vector<256x128xf32>
    %10 = tpu.matmul %9, %6, %cst {dimension_numbers = #tpu.dot_dimension_numbers<[1], [0], [0], [1], [0, 0, 1, 1], [], []>} : vector<256x512xbf16>, vector<512x128xbf16>, vector<256x128xf32> -> vector<256x128xf32>
    %11 = arith.addf %7, %10 : vector<256x128xf32>
    %c0_5 = arith.constant 0 : index
    %c0_6 = arith.constant 0 : index
    %12 = vector.load %arg5[%c0_5, %c0_6] : memref<256x128xf32, #tpu.memory_space<vmem>>, vector<256x128xf32>
    tpu.vector_store %arg5[%c0_5, %c0_6], %11 {strides = array<i32>} : memref<256x128xf32, #tpu.memory_space<vmem>>, vector<256x128xf32>,
    %c0_i32_7 = arith.constant 0 : i32
    %13 = arith.cmpi eq, %arg1, %c0_i32_7 : i32
    %14 = arith.extui %13 : i1 to i32
    %c0_i32_8 = arith.constant 0 : i32
    %15 = arith.cmpi ne, %14, %c0_i32_8 : i32
    scf.if %15 {
      %c0_9 = arith.constant 0 : index
      %c0_10 = arith.constant 0 : index
      %16 = vector.load %arg5[%c0_9, %c0_10] : memref<256x128xf32, #tpu.memory_space<vmem>>, vector<256x128xf32>
      %c0_11 = arith.constant 0 : index
      %c0_12 = arith.constant 0 : index
      %17 = vector.load %arg4[%c0_11, %c0_12] : memref<256x128xf32, #tpu.memory_space<vmem>>, vector<256x128xf32>
      tpu.vector_store %arg4[%c0_11, %c0_12], %16 {strides = array<i32>} : memref<256x128xf32, #tpu.memory_space<vmem>>, vector<256x128xf32>,
    } else {
    }
    return
  }
  func.func @transform_0(%arg0: i32, %arg1: i32) -> (i32, i32) {
    %c0_i32 = arith.constant 0 : i32
    %c0_i32_0 = arith.constant 0 : i32
    %c0_i32_1 = arith.constant 0 : i32
    return %c0_i32, %c0_i32_0 : i32, i32
  }
  func.func @transform_1(%arg0: i32, %arg1: i32) -> (i32, i32) {
    %c0_i32 = arith.constant 0 : i32
    return %arg0, %arg1 : i32, i32
  }
  func.func @transform_2(%arg0: i32, %arg1: i32) -> (i32, i32) {
    %c0_i32 = arith.constant 0 : i32
    %c0_i32_0 = arith.constant 0 : i32
    return %arg0, %c0_i32 : i32, i32
  }
}

</mosaic_0001>

<llo_original>
// kernel: tpu_custom_call.1
$region0: #{tpu_custom_call.1}
  #allocation0 [shape = 'u32[]', space=smem, size = 0x4, offset = 0x4, fixed_abs, tag = 'smem constant byte address 0x4 - core index']
  #allocation1 [shape = 'u32[144,128]{1,0:T(1,128)}', space=vmem, size = 0x12000, scoped, tag = 'internal scratch']
  #allocation2 [shape = 'f32[256,128]{1,0:T(8,128)}', space=vmem, size = 0x20000, scoped, tag = 'scratch operand']
  %s0 = inlined_call_operand.hbm [shape: bf16[512,128], index: 0, kind: input, shape index: {}]
  %s1 = inlined_call_operand.hbm [shape: f32[512,512], index: 1, kind: input, shape index: {}]
  %s2 = inlined_call_operand.hbm [shape: f32[512,128], index: 2, kind: output, shape index: {}]
  %s3 = sld [smem:[#allocation0]]
  $region57: #{tpu_custom_call.1} parent=0
    _
  %s5 = ssub.s32 1, %s3
  %s6 = scalar_select 0, %s5, %s3
  $region1: #{tpu_custom_call.1} parent=0
    #allocation3 [shape = 'u8[131072]{0}', space=vmem, size = 0x20000, scoped, tag = 'input window, operand 0, single buffered']
    #allocation4 [shape = 's32[2]{0}', space=sflag, size = 0x8, scoped, tag = 'scoped memory for tpu_custom_call.1']
    #allocation5 [shape = 's32[2]{0}', space=sflag, size = 0x8, scoped, tag = 'scoped memory for tpu_custom_call.1']
    #allocation6 [shape = 'u8[1048576]{0}', space=vmem, size = 0x100000, scoped, tag = 'input window, operand 1']
    #allocation7 [shape = 's32[2]{0}', space=sflag, size = 0x8, scoped, tag = 'scoped memory for tpu_custom_call.1']
    #allocation8 [shape = 'u8[262144]{0}', space=vmem, size = 0x40000, scoped, tag = 'output window, operand 0']
    %7 = vsyncpa [#allocation4], 0
    %8 = vsyncpa [#allocation7], 0
    %s9 = scalar_lea.sflag [#allocation7], 1
    %10 = vsyncpa %s9, 0
    %11 = vsyncpa [#allocation5], 0
    %s12 = scalar_lea.sflag [#allocation5], 1
    %13 = vsyncpa %s12, 0
    loop: start=0, step=1, limit=4
    $region2: #{tpu_custom_call.1} parent=1 // loop_pre_header
      _
    $region3: #{tpu_custom_call.1} parent=1 // loop_header
      %s15 = sphi 0, %s19
      %p16 = scmp.ge.s32.totalorder %s15, 4
      %s22 = sphi 0, %s34
      %s23 = sphi 0, %s30
      %s24 = sphi 0, %s22
      %s25 = sphi 0, %s23
      %s26 = sphi 0, %s24
      %s27 = sphi 0, %s25
      %s35 = sphi 0, %s35
      %s37 = sphi 0, %s35
      %s38 = sphi 0, %s37
      %s52 = sphi 0, %s38
      %s60 = sphi 0, %s62
      %s63 = sphi 0, %s60
      %s64 = sphi 0, %s63
      %s80 = sphi 0, %s64
      %s86 = sphi 0, %s88
      %s89 = sphi 0, %s86
      %s90 = sphi 0, %s89
      %s106 = sphi 0, %s90
    $region4: #{tpu_custom_call.1} parent=1 // loop_header_branch
      %18 = sbr.rel (%p16) target = $region8
    $region5: #{tpu_custom_call.1} parent=1 // loop_body
      %s20 = ssub.s32 %s15, 1
      %s21 = ssub.s32 %s15, 2
      %s28 = sadd.s32 1, %s23
      %p29 = scmp.ge.s32.totalorder %s28, 1
      %s30 = scalar_select %p29, 0, %s28
      %s31 = sadd.s32 1, %s22
      %s32 = scalar_select %p29, %s31, %s22
      %p33 = scmp.ge.s32.totalorder %s32, 2
      %s34 = scalar_select %p33, 0, %s32
      %s36 = sadd.s32 %s35, 1
      %p39 = scmp.eq.s32.totalorder %s15, 1
      %p40 = scmp.ne.s32.totalorder %s35, %s37
      %p41 = scmp.eq.s32.totalorder %s15, 0
      %p42 = por %p40, %p41
      %p43 = scmp.ne.s32.totalorder %s35, %s37
      %p44 = scmp.eq.s32.totalorder %s20, 1
      %p45 = por %p43, %p44
      %p46 = scmp.ne.s32.totalorder %s37, %s38
      %p47 = scmp.eq.s32.totalorder %s20, 0
      %p48 = por %p46, %p47
      %p49 = scmp.ne.s32.totalorder %s37, %s38
      %p50 = scmp.eq.s32.totalorder %s21, 1
      %p51 = por %p49, %p50
      %p53 = scmp.ne.s32.totalorder %s38, %s52
      %p54 = scmp.eq.s32.totalorder %s21, 0
      %p55 = por %p53, %p54
      %s56 = ssub.s32 %s22, %s34
      %s57 = ssub.s32 %s23, %s30
      %s58 = sor.u32 %s56, %s57
      %p59 = scmp.eq.s32.totalorder %s58, 0
      %s61 = sadd.s32 %s60, 1
      %s62 = scalar_select %p59, %s60, %s61
      %p65 = pneg %p59
      %p66 = scmp.eq.s32.totalorder %s15, 1
      %p67 = por %p65, %p66
      %p68 = scmp.ne.s32.totalorder %s60, %s63
      %p69 = scmp.eq.s32.totalorder %s15, 0
      %p70 = por %p68, %p69
      %p71 = scmp.ne.s32.totalorder %s60, %s63
      %p72 = scmp.eq.s32.totalorder %s20, 1
      %p73 = por %p71, %p72
      %p74 = scmp.ne.s32.totalorder %s63, %s64
      %p75 = scmp.eq.s32.totalorder %s20, 0
      %p76 = por %p74, %p75
      %p77 = scmp.ne.s32.totalorder %s63, %s64
      %p78 = scmp.eq.s32.totalorder %s21, 1
      %p79 = por %p77, %p78
      %p81 = scmp.ne.s32.totalorder %s64, %s80
      %p82 = scmp.eq.s32.totalorder %s21, 0
      %p83 = por %p81, %p82
      %s84 = ssub.s32 %s22, %s34
      %p85 = scmp.eq.s32.totalorder %s84, 0
      %s87 = sadd.s32 %s86, 1
      %s88 = scalar_select %p85, %s86, %s87
      %p91 = pneg %p85
      %p92 = scmp.eq.s32.totalorder %s15, 1
      %p93 = por %p91, %p92
      %p94 = scmp.ne.s32.totalorder %s86, %s89
      %p95 = scmp.eq.s32.totalorder %s15, 0
      %p96 = por %p94, %p95
      %p97 = scmp.ne.s32.totalorder %s86, %s89
      %p98 = scmp.eq.s32.totalorder %s20, 1
      %p99 = por %p97, %p98
      %p100 = scmp.ne.s32.totalorder %s89, %s90
      %p101 = scmp.eq.s32.totalorder %s20, 0
      %p102 = por %p100, %p101
      %p103 = scmp.ne.s32.totalorder %s89, %s90
      %p104 = scmp.eq.s32.totalorder %s21, 1
      %p105 = por %p103, %p104
      %p107 = scmp.ne.s32.totalorder %s90, %s106
      %p108 = scmp.eq.s32.totalorder %s21, 0
      %p109 = por %p107, %p108
      %p110 = scmp.le.s32.totalorder 1, %s15
      %p111 = scmp.lt.s32.totalorder %s15, 3
      %p112 = pnand %p110, %p111
      %p113 = pneg %p112
      // Predicated region
      $region9: #{tpu_custom_call.1} parent=5 // pred_check
        _
      $region10: #{tpu_custom_call.1} parent=5 // pred_check_branch
        %115 = sbr.rel (%p112) target = $region12
      $region11: #{tpu_custom_call.1} parent=5 // pred_region
        %s116 = ssub.s32 %s15, 1
        // Predicated region
        $region13: #{tpu_custom_call.1} parent=11 // pred_check
          %p117 = pneg %p48
        $region14: #{tpu_custom_call.1} parent=11 // pred_check_branch
          %119 = sbr.rel (%p117) target = $region16
        $region15: #{tpu_custom_call.1} parent=11 // pred_region
          %s121 = ssub.s32 4096, 4096
          %122 = vsyncadd [#allocation4], %s121
          %s123 = sshll.u32 [#allocation3], 4
          %s124 = int_to_ptr.vmem [resolvable:$true] %s123
          %129 = dma.hbm_to_vmem [thread:$0]  %s0, 4096, %s124, [#allocation4], 64, 64, 4
        $region16: #{tpu_custom_call.1} parent=11 // pred_fallthru
          _
      $region12: #{tpu_custom_call.1} parent=5 // pred_fallthru
        _
      %p130 = scmp.lt.s32.totalorder %s15, 2
      // Predicated region
      $region17: #{tpu_custom_call.1} parent=5 // pred_check
        %p131 = pneg %p130
      $region18: #{tpu_custom_call.1} parent=5 // pred_check_branch
        %133 = sbr.rel (%p131) target = $region20
      $region19: #{tpu_custom_call.1} parent=5 // pred_region
        // Predicated region
        $region21: #{tpu_custom_call.1} parent=19 // pred_check
          %p134 = pneg %p70
        $region22: #{tpu_custom_call.1} parent=19 // pred_check_branch
          %136 = sbr.rel (%p134) target = $region24
        $region23: #{tpu_custom_call.1} parent=19 // pred_region
          %s137 = sand.u32 %s60, 1
          %s138 = scalar_lea.sflag [#allocation7], %s137
          %s139 = sand.u32 %s60, 1
          %s140 = smul.addr %s139, 1024
          %s141 = scalar_lea.vmem [#allocation6], %s140
          %s142 = smul.u32 32, %s22
          %s143 = smul.u32 4, %s23
          %s145 = ssub.s32 16384, 16384
          %146 = vsyncadd %s138, %s145
          %s147 = smul.addr %s142, 4
          %s148 = sadd.s32 %s143, %s147
          %s149 = smul.addr %s148, 128
          %s150 = scalar_lea.hbm %s1, %s149
          %s151 = sshll.u32 %s141, 4
          %s152 = int_to_ptr.vmem [resolvable:$true] %s151
          %157 = dma.hbm_to_vmem [thread:$0]  %s150, 16384, %s152, %s138, 512, 512, 32
        $region24: #{tpu_custom_call.1} parent=19 // pred_fallthru
          _
      $region20: #{tpu_custom_call.1} parent=5 // pred_fallthru
        _
      %p158 = scmp.le.s32.totalorder 1, %s15
      %p159 = scmp.lt.s32.totalorder %s15, 3
      %p160 = pnand %p158, %p159
      %p161 = pneg %p160
      // Predicated region
      $region25: #{tpu_custom_call.1} parent=5 // pred_check
        _
      $region26: #{tpu_custom_call.1} parent=5 // pred_check_branch
        %163 = sbr.rel (%p160) target = $region28
      $region27: #{tpu_custom_call.1} parent=5 // pred_region
        %s164 = ssub.s32 %s15, 1
        // Predicated region
        $region29: #{tpu_custom_call.1} parent=27 // pred_check
          %p165 = pneg %p48
        $region30: #{tpu_custom_call.1} parent=27 // pred_check_branch
          %167 = sbr.rel (%p165) target = $region32
        $region31: #{tpu_custom_call.1} parent=27 // pred_region
          %168 = dma.done [#allocation4], 4096
        $region32: #{tpu_custom_call.1} parent=27 // pred_fallthru
          _
        %s169 = sand.u32 %s63, 1
        %s170 = scalar_lea.sflag [#allocation7], %s169
        %s171 = sand.u32 %s63, 1
        %s172 = smul.addr %s171, 1024
        %s173 = scalar_lea.vmem [#allocation6], %s172
        // Predicated region
        $region33: #{tpu_custom_call.1} parent=27 // pred_check
          %p174 = pneg %p76
        $region34: #{tpu_custom_call.1} parent=27 // pred_check_branch
          %176 = sbr.rel (%p174) target = $region36
        $region35: #{tpu_custom_call.1} parent=27 // pred_region
          %177 = dma.done %s170, 16384
        $region36: #{tpu_custom_call.1} parent=27 // pred_fallthru
          _
        %p178 = pneg %p48
        %p179 = pneg %p45
        %s180 = sand.u32 %s63, 1
        %s181 = scalar_lea.sflag [#allocation7], %s180
        %s182 = sand.u32 %s63, 1
        %s183 = smul.addr %s182, 1024
        %s184 = scalar_lea.vmem [#allocation6], %s183
        %p185 = pneg %p76
        %p186 = pneg %p73
        %p187 = pneg %p102
        %p188 = pneg %p99
        %s189 = sand.u32 %s89, 1
        %s190 = scalar_lea.sflag [#allocation5], %s189
        %s191 = sand.u32 %s89, 1
        %s192 = smul.addr %s191, 256
        %s193 = scalar_lea.vmem [#allocation8], %s192
        %s194 = smul.u32 32, %s24
        %s195 = smul.u32 4, %s25
        %s196 = smul.u32 32, %s24
        %p198 = scmp.eq.s32.totalorder %s25, 0
        // Predicated region
        $region37: #{tpu_custom_call.1} parent=27 // pred_check
          %p199 = pneg %p198
        $region38: #{tpu_custom_call.1} parent=27 // pred_check_branch
          %201 = sbr.rel (%p199) target = $region40
        $region39: #{tpu_custom_call.1} parent=27 // pred_region
          %202 = vst [vmem:[#allocation2] sm:$0xff] 0.0
          %203 = vst [vmem:[#allocation2 + $0x8] sm:$0xff] 0.0
          %204 = vst [vmem:[#allocation2 + $0x10] sm:$0xff] 0.0
          %205 = vst [vmem:[#allocation2 + $0x18] sm:$0xff] 0.0
          %206 = vst [vmem:[#allocation2 + $0x20] sm:$0xff] 0.0
          %207 = vst [vmem:[#allocation2 + $0x28] sm:$0xff] 0.0
          %208 = vst [vmem:[#allocation2 + $0x30] sm:$0xff] 0.0
          %209 = vst [vmem:[#allocation2 + $0x38] sm:$0xff] 0.0
          %210 = vst [vmem:[#allocation2 + $0x40] sm:$0xff] 0.0
          %211 = vst [vmem:[#allocation2 + $0x48] sm:$0xff] 0.0
          %212 = vst [vmem:[#allocation2 + $0x50] sm:$0xff] 0.0
          %213 = vst [vmem:[#allocation2 + $0x58] sm:$0xff] 0.0
          %214 = vst [vmem:[#allocation2 + $0x60] sm:$0xff] 0.0
          %215 = vst [vmem:[#allocation2 + $0x68] sm:$0xff] 0.0
          %216 = vst [vmem:[#allocation2 + $0x70] sm:$0xff] 0.0
          %217 = vst [vmem:[#allocation2 + $0x78] sm:$0xff] 0.0
          %218 = vst [vmem:[#allocation2 + $0x80] sm:$0xff] 0.0
          %219 = vst [vmem:[#allocation2 + $0x88] sm:$0xff] 0.0
          %220 = vst [vmem:[#allocation2 + $0x90] sm:$0xff] 0.0
          %221 = vst [vmem:[#allocation2 + $0x98] sm:$0xff] 0.0
          %222 = vst [vmem:[#allocation2 + $0xa0] sm:$0xff] 0.0
          %223 = vst [vmem:[#allocation2 + $0xa8] sm:$0xff] 0.0
          %224 = vst [vmem:[#allocation2 + $0xb0] sm:$0xff] 0.0
          %225 = vst [vmem:[#allocation2 + $0xb8] sm:$0xff] 0.0
          %226 = vst [vmem:[#allocation2 + $0xc0] sm:$0xff] 0.0
          %227 = vst [vmem:[#allocation2 + $0xc8] sm:$0xff] 0.0
          %228 = vst [vmem:[#allocation2 + $0xd0] sm:$0xff] 0.0
          %229 = vst [vmem:[#allocation2 + $0xd8] sm:$0xff] 0.0
          %230 = vst [vmem:[#allocation2 + $0xe0] sm:$0xff] 0.0
          %231 = vst [vmem:[#allocation2 + $0xe8] sm:$0xff] 0.0
          %232 = vst [vmem:[#allocation2 + $0xf0] sm:$0xff] 0.0
          %233 = vst [vmem:[#allocation2 + $0xf8] sm:$0xff] 0.0
        $region40: #{tpu_custom_call.1} parent=27 // pred_fallthru
          _
        %s234 = smul.u32 %s25, 512
        %s235 = sshra.s32 %s234, 3
        %s236 = sand.u32 %s234, 7
        %s237 = smul.addr %s235, 4
        %s238 = scalar_lea.vmem [#allocation3], %s237
        %v239 = vld [vmem:[%s238] sm:$0xf]
        %v240 = vld [vmem:[%s238 + $0x4] sm:$0xf]
        %v241 = vld [vmem:[%s238 + $0x8] sm:$0xf]
        %v242 = vld [vmem:[%s238 + $0xc] sm:$0xf]
        %v243 = vld [vmem:[%s238 + $0x10] sm:$0xf]
        %v244 = vld [vmem:[%s238 + $0x14] sm:$0xf]
        %v245 = vld [vmem:[%s238 + $0x18] sm:$0xf]
        %v246 = vld [vmem:[%s238 + $0x1c] sm:$0xf]
        %v247 = vld [vmem:[%s238 + $0x20] sm:$0xf]
        %v248 = vld [vmem:[%s238 + $0x24] sm:$0xf]
        %v249 = vld [vmem:[%s238 + $0x28] sm:$0xf]
        %v250 = vld [vmem:[%s238 + $0x2c] sm:$0xf]
        %v251 = vld [vmem:[%s238 + $0x30] sm:$0xf]
        %v252 = vld [vmem:[%s238 + $0x34] sm:$0xf]
        %v253 = vld [vmem:[%s238 + $0x38] sm:$0xf]
        %v254 = vld [vmem:[%s238 + $0x3c] sm:$0xf]
        %v255 = vld [vmem:[%s238 + $0x40] sm:$0xf]
        %v256 = vld [vmem:[%s238 + $0x44] sm:$0xf]
        %v257 = vld [vmem:[%s238 + $0x48] sm:$0xf]
        %v258 = vld [vmem:[%s238 + $0x4c] sm:$0xf]
        %v259 = vld [vmem:[%s238 + $0x50] sm:$0xf]
        %v260 = vld [vmem:[%s238 + $0x54] sm:$0xf]
        %v261 = vld [vmem:[%s238 + $0x58] sm:$0xf]
        %v262 = vld [vmem:[%s238 + $0x5c] sm:$0xf]
        %v263 = vld [vmem:[%s238 + $0x60] sm:$0xf]
        %v264 = vld [vmem:[%s238 + $0x64] sm:$0xf]
        %v265 = vld [vmem:[%s238 + $0x68] sm:$0xf]
        %v266 = vld [vmem:[%s238 + $0x6c] sm:$0xf]
        %v267 = vld [vmem:[%s238 + $0x70] sm:$0xf]
        %v268 = vld [vmem:[%s238 + $0x74] sm:$0xf]
        %v269 = vld [vmem:[%s238 + $0x78] sm:$0xf]
        %v270 = vld [vmem:[%s238 + $0x7c] sm:$0xf]
        %v271 = vld [vmem:[%s238 + $0x80] sm:$0xf]
        %v272 = vld [vmem:[%s238 + $0x84] sm:$0xf]
        %v273 = vld [vmem:[%s238 + $0x88] sm:$0xf]
        %v274 = vld [vmem:[%s238 + $0x8c] sm:$0xf]
        %v275 = vld [vmem:[%s238 + $0x90] sm:$0xf]
        %v276 = vld [vmem:[%s238 + $0x94] sm:$0xf]
        %v277 = vld [vmem:[%s238 + $0x98] sm:$0xf]
        %v278 = vld [vmem:[%s238 + $0x9c] sm:$0xf]
        %v279 = vld [vmem:[%s238 + $0xa0] sm:$0xf]
        %v280 = vld [vmem:[%s238 + $0xa4] sm:$0xf]
        %v281 = vld [vmem:[%s238 + $0xa8] sm:$0xf]
        %v282 = vld [vmem:[%s238 + $0xac] sm:$0xf]
        %v283 = vld [vmem:[%s238 + $0xb0] sm:$0xf]
        %v284 = vld [vmem:[%s238 + $0xb4] sm:$0xf]
        %v285 = vld [vmem:[%s238 + $0xb8] sm:$0xf]
        %v286 = vld [vmem:[%s238 + $0xbc] sm:$0xf]
        %v287 = vld [vmem:[%s238 + $0xc0] sm:$0xf]
        %v288 = vld [vmem:[%s238 + $0xc4] sm:$0xf]
        %v289 = vld [vmem:[%s238 + $0xc8] sm:$0xf]
        %v290 = vld [vmem:[%s238 + $0xcc] sm:$0xf]
        %v291 = vld [vmem:[%s238 + $0xd0] sm:$0xf]
        %v292 = vld [vmem:[%s238 + $0xd4] sm:$0xf]
        %v293 = vld [vmem:[%s238 + $0xd8] sm:$0xf]
        %v294 = vld [vmem:[%s238 + $0xdc] sm:$0xf]
        %v295 = vld [vmem:[%s238 + $0xe0] sm:$0xf]
        %v296 = vld [vmem:[%s238 + $0xe4] sm:$0xf]
        %v297 = vld [vmem:[%s238 + $0xe8] sm:$0xf]
        %v298 = vld [vmem:[%s238 + $0xec] sm:$0xf]
        %v299 = vld [vmem:[%s238 + $0xf0] sm:$0xf]
        %v300 = vld [vmem:[%s238 + $0xf4] sm:$0xf]
        %v301 = vld [vmem:[%s238 + $0xf8] sm:$0xf]
        %v302 = vld [vmem:[%s238 + $0xfc] sm:$0xf]
        %v303 = vld [vmem:[#allocation2] sm:$0xff]
        %v304 = vld [vmem:[#allocation2 + $0x8] sm:$0xff]
        %v305 = vld [vmem:[#allocation2 + $0x10] sm:$0xff]
        %v306 = vld [vmem:[#allocation2 + $0x18] sm:$0xff]
        %v307 = vld [vmem:[#allocation2 + $0x20] sm:$0xff]
        %v308 = vld [vmem:[#allocation2 + $0x28] sm:$0xff]
        %v309 = vld [vmem:[#allocation2 + $0x30] sm:$0xff]
        %v310 = vld [vmem:[#allocation2 + $0x38] sm:$0xff]
        %v311 = vld [vmem:[#allocation2 + $0x40] sm:$0xff]
        %v312 = vld [vmem:[#allocation2 + $0x48] sm:$0xff]
        %v313 = vld [vmem:[#allocation2 + $0x50] sm:$0xff]
        %v314 = vld [vmem:[#allocation2 + $0x58] sm:$0xff]
        %v315 = vld [vmem:[#allocation2 + $0x60] sm:$0xff]
        %v316 = vld [vmem:[#allocation2 + $0x68] sm:$0xff]
        %v317 = vld [vmem:[#allocation2 + $0x70] sm:$0xff]
        %v318 = vld [vmem:[#allocation2 + $0x78] sm:$0xff]
        %v319 = vld [vmem:[#allocation2 + $0x80] sm:$0xff]
        %v320 = vld [vmem:[#allocation2 + $0x88] sm:$0xff]
        %v321 = vld [vmem:[#allocation2 + $0x90] sm:$0xff]
        %v322 = vld [vmem:[#allocation2 + $0x98] sm:$0xff]
        %v323 = vld [vmem:[#allocation2 + $0xa0] sm:$0xff]
        %v324 = vld [vmem:[#allocation2 + $0xa8] sm:$0xff]
        %v325 = vld [vmem:[#allocation2 + $0xb0] sm:$0xff]
        %v326 = vld [vmem:[#allocation2 + $0xb8] sm:$0xff]
        %v327 = vld [vmem:[#allocation2 + $0xc0] sm:$0xff]
        %v328 = vld [vmem:[#allocation2 + $0xc8] sm:$0xff]
        %v329 = vld [vmem:[#allocation2 + $0xd0] sm:$0xff]
        %v330 = vld [vmem:[#allocation2 + $0xd8] sm:$0xff]
        %v331 = vld [vmem:[#allocation2 + $0xe0] sm:$0xff]
        %v332 = vld [vmem:[#allocation2 + $0xe8] sm:$0xff]
        %v333 = vld [vmem:[#allocation2 + $0xf0] sm:$0xff]
        %v334 = vld [vmem:[#allocation2 + $0xf8] sm:$0xff]
        %v335 = vld [vmem:[%s173] sm:$0xff]
        %v336 = vld [vmem:[%s173 + $0x8] sm:$0xff]
        %v337 = vld [vmem:[%s173 + $0x10] sm:$0xff]
        %v338 = vld [vmem:[%s173 + $0x18] sm:$0xff]
        %v339 = vld [vmem:[%s173 + $0x20] sm:$0xff]
        %v340 = vld [vmem:[%s173 + $0x28] sm:$0xff]
        %v341 = vld [vmem:[%s173 + $0x30] sm:$0xff]
        %v342 = vld [vmem:[%s173 + $0x38] sm:$0xff]
        %v343 = vld [vmem:[%s173 + $0x40] sm:$0xff]
        %v344 = vld [vmem:[%s173 + $0x48] sm:$0xff]
        %v345 = vld [vmem:[%s173 + $0x50] sm:$0xff]
        %v346 = vld [vmem:[%s173 + $0x58] sm:$0xff]
        %v347 = vld [vmem:[%s173 + $0x60] sm:$0xff]
        %v348 = vld [vmem:[%s173 + $0x68] sm:$0xff]
        %v349 = vld [vmem:[%s173 + $0x70] sm:$0xff]
        %v350 = vld [vmem:[%s173 + $0x78] sm:$0xff]
        %v351 = vld [vmem:[%s173 + $0x80] sm:$0xff]
        %v352 = vld [vmem:[%s173 + $0x88] sm:$0xff]
        %v353 = vld [vmem:[%s173 + $0x90] sm:$0xff]
        %v354 = vld [vmem:[%s173 + $0x98] sm:$0xff]
        %v355 = vld [vmem:[%s173 + $0xa0] sm:$0xff]
        %v356 = vld [vmem:[%s173 + $0xa8] sm:$0xff]
        %v357 = vld [vmem:[%s173 + $0xb0] sm:$0xff]
        %v358 = vld [vmem:[%s173 + $0xb8] sm:$0xff]
        %v359 = vld [vmem:[%s173 + $0xc0] sm:$0xff]
        %v360 = vld [vmem:[%s173 + $0xc8] sm:$0xff]
        %v361 = vld [vmem:[%s173 + $0xd0] sm:$0xff]
        %v362 = vld [vmem:[%s173 + $0xd8] sm:$0xff]
        %v363 = vld [vmem:[%s173 + $0xe0] sm:$0xff]
        %v364 = vld [vmem:[%s173 + $0xe8] sm:$0xff]
        %v365 = vld [vmem:[%s173 + $0xf0] sm:$0xff]
        %v366 = vld [vmem:[%s173 + $0xf8] sm:$0xff]
        %v367 = vld [vmem:[%s173 + $0x100] sm:$0xff]
        %v368 = vld [vmem:[%s173 + $0x108] sm:$0xff]
        %v369 = vld [vmem:[%s173 + $0x110] sm:$0xff]
        %v370 = vld [vmem:[%s173 + $0x118] sm:$0xff]
        %v371 = vld [vmem:[%s173 + $0x120] sm:$0xff]
        %v372 = vld [vmem:[%s173 + $0x128] sm:$0xff]
        %v373 = vld [vmem:[%s173 + $0x130] sm:$0xff]
        %v374 = vld [vmem:[%s173 + $0x138] sm:$0xff]
        %v375 = vld [vmem:[%s173 + $0x140] sm:$0xff]
        %v376 = vld [vmem:[%s173 + $0x148] sm:$0xff]
        %v377 = vld [vmem:[%s173 + $0x150] sm:$0xff]
        %v378 = vld [vmem:[%s173 + $0x158] sm:$0xff]
        %v379 = vld [vmem:[%s173 + $0x160] sm:$0xff]
        %v380 = vld [vmem:[%s173 + $0x168] sm:$0xff]
        %v381 = vld [vmem:[%s173 + $0x170] sm:$0xff]
        %v382 = vld [vmem:[%s173 + $0x178] sm:$0xff]
        %v383 = vld [vmem:[%s173 + $0x180] sm:$0xff]
        %v384 = vld [vmem:[%s173 + $0x188] sm:$0xff]
        %v385 = vld [vmem:[%s173 + $0x190] sm:$0xff]
        %v386 = vld [vmem:[%s173 + $0x198] sm:$0xff]
        %v387 = vld [vmem:[%s173 + $0x1a0] sm:$0xff]
        %v388 = vld [vmem:[%s173 + $0x1a8] sm:$0xff]
        %v389 = vld [vmem:[%s173 + $0x1b0] sm:$0xff]
        %v390 = vld [vmem:[%s173 + $0x1b8] sm:$0xff]
        %v391 = vld [vmem:[%s173 + $0x1c0] sm:$0xff]
        %v392 = vld [vmem:[%s173 + $0x1c8] sm:$0xff]
        %v393 = vld [vmem:[%s173 + $0x1d0] sm:$0xff]
        %v394 = vld [vmem:[%s173 + $0x1d8] sm:$0xff]
        %v395 = vld [vmem:[%s173 + $0x1e0] sm:$0xff]
        %v396 = vld [vmem:[%s173 + $0x1e8] sm:$0xff]
        %v397 = vld [vmem:[%s173 + $0x1f0] sm:$0xff]
        %v398 = vld [vmem:[%s173 + $0x1f8] sm:$0xff]
        %v399 = vld [vmem:[%s173 + $0x200] sm:$0xff]
        %v400 = vld [vmem:[%s173 + $0x208] sm:$0xff]
        %v401 = vld [vmem:[%s173 + $0x210] sm:$0xff]
        %v402 = vld [vmem:[%s173 + $0x218] sm:$0xff]
        %v403 = vld [vmem:[%s173 + $0x220] sm:$0xff]
        %v404 = vld [vmem:[%s173 + $0x228] sm:$0xff]
        %v405 = vld [vmem:[%s173 + $0x230] sm:$0xff]
        %v406 = vld [vmem:[%s173 + $0x238] sm:$0xff]
        %v407 = vld [vmem:[%s173 + $0x240] sm:$0xff]
        %v408 = vld [vmem:[%s173 + $0x248] sm:$0xff]
        %v409 = vld [vmem:[%s173 + $0x250] sm:$0xff]
        %v410 = vld [vmem:[%s173 + $0x258] sm:$0xff]
        %v411 = vld [vmem:[%s173 + $0x260] sm:$0xff]
        %v412 = vld [vmem:[%s173 + $0x268] sm:$0xff]
        %v413 = vld [vmem:[%s173 + $0x270] sm:$0xff]
        %v414 = vld [vmem:[%s173 + $0x278] sm:$0xff]
        %v415 = vld [vmem:[%s173 + $0x280] sm:$0xff]
        %v416 = vld [vmem:[%s173 + $0x288] sm:$0xff]
        %v417 = vld [vmem:[%s173 + $0x290] sm:$0xff]
        %v418 = vld [vmem:[%s173 + $0x298] sm:$0xff]
        %v419 = vld [vmem:[%s173 + $0x2a0] sm:$0xff]
        %v420 = vld [vmem:[%s173 + $0x2a8] sm:$0xff]
        %v421 = vld [vmem:[%s173 + $0x2b0] sm:$0xff]
        %v422 = vld [vmem:[%s173 + $0x2b8] sm:$0xff]
        %v423 = vld [vmem:[%s173 + $0x2c0] sm:$0xff]
        %v424 = vld [vmem:[%s173 + $0x2c8] sm:$0xff]
        %v425 = vld [vmem:[%s173 + $0x2d0] sm:$0xff]
        %v426 = vld [vmem:[%s173 + $0x2d8] sm:$0xff]
        %v427 = vld [vmem:[%s173 + $0x2e0] sm:$0xff]
        %v428 = vld [vmem:[%s173 + $0x2e8] sm:$0xff]
        %v429 = vld [vmem:[%s173 + $0x2f0] sm:$0xff]
        %v430 = vld [vmem:[%s173 + $0x2f8] sm:$0xff]
        %v431 = vld [vmem:[%s173 + $0x300] sm:$0xff]
        %v432 = vld [vmem:[%s173 + $0x308] sm:$0xff]
        %v433 = vld [vmem:[%s173 + $0x310] sm:$0xff]
        %v434 = vld [vmem:[%s173 + $0x318] sm:$0xff]
        %v435 = vld [vmem:[%s173 + $0x320] sm:$0xff]
        %v436 = vld [vmem:[%s173 + $0x328] sm:$0xff]
        %v437 = vld [vmem:[%s173 + $0x330] sm:$0xff]
        %v438 = vld [vmem:[%s173 + $0x338] sm:$0xff]
        %v439 = vld [vmem:[%s173 + $0x340] sm:$0xff]
        %v440 = vld [vmem:[%s173 + $0x348] sm:$0xff]
        %v441 = vld [vmem:[%s173 + $0x350] sm:$0xff]
        %v442 = vld [vmem:[%s173 + $0x358] sm:$0xff]
        %v443 = vld [vmem:[%s173 + $0x360] sm:$0xff]
        %v444 = vld [vmem:[%s173 + $0x368] sm:$0xff]
        %v445 = vld [vmem:[%s173 + $0x370] sm:$0xff]
        %v446 = vld [vmem:[%s173 + $0x378] sm:$0xff]
        %v447 = vld [vmem:[%s173 + $0x380] sm:$0xff]
        %v448 = vld [vmem:[%s173 + $0x388] sm:$0xff]
        %v449 = vld [vmem:[%s173 + $0x390] sm:$0xff]
        %v450 = vld [vmem:[%s173 + $0x398] sm:$0xff]
        %v451 = vld [vmem:[%s173 + $0x3a0] sm:$0xff]
        %v452 = vld [vmem:[%s173 + $0x3a8] sm:$0xff]
        %v453 = vld [vmem:[%s173 + $0x3b0] sm:$0xff]
        %v454 = vld [vmem:[%s173 + $0x3b8] sm:$0xff]
        %v455 = vld [vmem:[%s173 + $0x3c0] sm:$0xff]
        %v456 = vld [vmem:[%s173 + $0x3c8] sm:$0xff]
        %v457 = vld [vmem:[%s173 + $0x3d0] sm:$0xff]
        %v458 = vld [vmem:[%s173 + $0x3d8] sm:$0xff]
        %v459 = vld [vmem:[%s173 + $0x3e0] sm:$0xff]
        %v460 = vld [vmem:[%s173 + $0x3e8] sm:$0xff]
        %v461 = vld [vmem:[%s173 + $0x3f0] sm:$0xff]
        %v462 = vld [vmem:[%s173 + $0x3f8] sm:$0xff]
        %v463 = vpack.c.bf16 %v339, %v335
        %v464 = vpack.c.bf16 %v340, %v336
        %v465 = vpack.c.bf16 %v341, %v337
        %v466 = vpack.c.bf16 %v342, %v338
        %v467 = vpack.c.bf16 %v347, %v343
        %v468 = vpack.c.bf16 %v348, %v344
        %v469 = vpack.c.bf16 %v349, %v345
        %v470 = vpack.c.bf16 %v350, %v346
        %v471 = vpack.c.bf16 %v355, %v351
        %v472 = vpack.c.bf16 %v356, %v352
        %v473 = vpack.c.bf16 %v357, %v353
        %v474 = vpack.c.bf16 %v358, %v354
        %v475 = vpack.c.bf16 %v363, %v359
        %v476 = vpack.c.bf16 %v364, %v360
        %v477 = vpack.c.bf16 %v365, %v361
        %v478 = vpack.c.bf16 %v366, %v362
        %v479 = vpack.c.bf16 %v371, %v367
        %v480 = vpack.c.bf16 %v372, %v368
        %v481 = vpack.c.bf16 %v373, %v369
        %v482 = vpack.c.bf16 %v374, %v370
        %v483 = vpack.c.bf16 %v379, %v375
        %v484 = vpack.c.bf16 %v380, %v376
        %v485 = vpack.c.bf16 %v381, %v377
        %v486 = vpack.c.bf16 %v382, %v378
        %v487 = vpack.c.bf16 %v387, %v383
        %v488 = vpack.c.bf16 %v388, %v384
        %v489 = vpack.c.bf16 %v389, %v385
        %v490 = vpack.c.bf16 %v390, %v386
        %v491 = vpack.c.bf16 %v395, %v391
        %v492 = vpack.c.bf16 %v396, %v392
        %v493 = vpack.c.bf16 %v397, %v393
        %v494 = vpack.c.bf16 %v398, %v394
        %v495 = vpack.c.bf16 %v403, %v399
        %v496 = vpack.c.bf16 %v404, %v400
        %v497 = vpack.c.bf16 %v405, %v401
        %v498 = vpack.c.bf16 %v406, %v402
        %v499 = vpack.c.bf16 %v411, %v407
        %v500 = vpack.c.bf16 %v412, %v408
        %v501 = vpack.c.bf16 %v413, %v409
        %v502 = vpack.c.bf16 %v414, %v410
        %v503 = vpack.c.bf16 %v419, %v415
        %v504 = vpack.c.bf16 %v420, %v416
        %v505 = vpack.c.bf16 %v421, %v417
        %v506 = vpack.c.bf16 %v422, %v418
        %v507 = vpack.c.bf16 %v427, %v423
        %v508 = vpack.c.bf16 %v428, %v424
        %v509 = vpack.c.bf16 %v429, %v425
        %v510 = vpack.c.bf16 %v430, %v426
        %v511 = vpack.c.bf16 %v435, %v431
        %v512 = vpack.c.bf16 %v436, %v432
        %v513 = vpack.c.bf16 %v437, %v433
        %v514 = vpack.c.bf16 %v438, %v434
        %v515 = vpack.c.bf16 %v443, %v439
        %v516 = vpack.c.bf16 %v444, %v440
        %v517 = vpack.c.bf16 %v445, %v441
        %v518 = vpack.c.bf16 %v446, %v442
        %v519 = vpack.c.bf16 %v451, %v447
        %v520 = vpack.c.bf16 %v452, %v448
        %v521 = vpack.c.bf16 %v453, %v449
        %v522 = vpack.c.bf16 %v454, %v450
        %v523 = vpack.c.bf16 %v459, %v455
        %v524 = vpack.c.bf16 %v460, %v456
        %v525 = vpack.c.bf16 %v461, %v457
        %v526 = vpack.c.bf16 %v462, %v458
        %v591 = vunpack.c.l.b16 %v239
        %v592 = vunpack.c.l.b16 %v240
        %v593 = vunpack.c.l.b16 %v241
        %v594 = vunpack.c.l.b16 %v242
        %v595 = vunpack.c.l.b16 %v243
        %v596 = vunpack.c.l.b16 %v244
        %v597 = vunpack.c.l.b16 %v245
        %v598 = vunpack.c.l.b16 %v246
        %v599 = vunpack.c.l.b16 %v247
        %v600 = vunpack.c.l.b16 %v248
        %v601 = vunpack.c.l.b16 %v249
        %v602 = vunpack.c.l.b16 %v250
        %v603 = vunpack.c.l.b16 %v251
        %v604 = vunpack.c.l.b16 %v252
        %v605 = vunpack.c.l.b16 %v253
        %v606 = vunpack.c.l.b16 %v254
        %v607 = vunpack.c.l.b16 %v255
        %v608 = vunpack.c.l.b16 %v256
        %v609 = vunpack.c.l.b16 %v257
        %v610 = vunpack.c.l.b16 %v258
        %v611 = vunpack.c.l.b16 %v259
        %v612 = vunpack.c.l.b16 %v260
        %v613 = vunpack.c.l.b16 %v261
        %v614 = vunpack.c.l.b16 %v262
        %v615 = vunpack.c.l.b16 %v263
        %v616 = vunpack.c.l.b16 %v264
        %v617 = vunpack.c.l.b16 %v265
        %v618 = vunpack.c.l.b16 %v266
        %v619 = vunpack.c.l.b16 %v267
        %v620 = vunpack.c.l.b16 %v268
        %v621 = vunpack.c.l.b16 %v269
        %v622 = vunpack.c.l.b16 %v270
        %v623 = vunpack.c.l.b16 %v271
        %v624 = vunpack.c.l.b16 %v272
        %v625 = vunpack.c.l.b16 %v273
        %v626 = vunpack.c.l.b16 %v274
        %v627 = vunpack.c.l.b16 %v275
        %v628 = vunpack.c.l.b16 %v276
        %v629 = vunpack.c.l.b16 %v277
        %v630 = vunpack.c.l.b16 %v278
        %v631 = vunpack.c.l.b16 %v279
        %v632 = vunpack.c.l.b16 %v280
        %v633 = vunpack.c.l.b16 %v281
        %v634 = vunpack.c.l.b16 %v282
        %v635 = vunpack.c.l.b16 %v283
        %v636 = vunpack.c.l.b16 %v284
        %v637 = vunpack.c.l.b16 %v285
        %v638 = vunpack.c.l.b16 %v286
        %v639 = vunpack.c.l.b16 %v287
        %v640 = vunpack.c.l.b16 %v288
        %v641 = vunpack.c.l.b16 %v289
        %v642 = vunpack.c.l.b16 %v290
        %v643 = vunpack.c.l.b16 %v291
        %v644 = vunpack.c.l.b16 %v292
        %v645 = vunpack.c.l.b16 %v293
        %v646 = vunpack.c.l.b16 %v294
        %v647 = vunpack.c.l.b16 %v295
        %v648 = vunpack.c.l.b16 %v296
        %v649 = vunpack.c.l.b16 %v297
        %v650 = vunpack.c.l.b16 %v298
        %v651 = vunpack.c.l.b16 %v299
        %v652 = vunpack.c.l.b16 %v300
        %v653 = vunpack.c.l.b16 %v301
        %v654 = vunpack.c.l.b16 %v302
        %v655 = vpack.c.b16 %v592, %v591
        %v656 = vpack.c.b16 %v594, %v593
        %v657 = vpack.c.b16 %v596, %v595
        %v658 = vpack.c.b16 %v598, %v597
        %v659 = vpack.c.b16 %v600, %v599
        %v660 = vpack.c.b16 %v602, %v601
        %v661 = vpack.c.b16 %v604, %v603
        %v662 = vpack.c.b16 %v606, %v605
        %v663 = vpack.c.b16 %v608, %v607
        %v664 = vpack.c.b16 %v610, %v609
        %v665 = vpack.c.b16 %v612, %v611
        %v666 = vpack.c.b16 %v614, %v613
        %v667 = vpack.c.b16 %v616, %v615
        %v668 = vpack.c.b16 %v618, %v617
        %v669 = vpack.c.b16 %v620, %v619
        %v670 = vpack.c.b16 %v622, %v621
        %v671 = vpack.c.b16 %v624, %v623
        %v672 = vpack.c.b16 %v626, %v625
        %v673 = vpack.c.b16 %v628, %v627
        %v674 = vpack.c.b16 %v630, %v629
        %v675 = vpack.c.b16 %v632, %v631
        %v676 = vpack.c.b16 %v634, %v633
        %v677 = vpack.c.b16 %v636, %v635
        %v678 = vpack.c.b16 %v638, %v637
        %v679 = vpack.c.b16 %v640, %v639
        %v680 = vpack.c.b16 %v642, %v641
        %v681 = vpack.c.b16 %v644, %v643
        %v682 = vpack.c.b16 %v646, %v645
        %v683 = vpack.c.b16 %v648, %v647
        %v684 = vpack.c.b16 %v650, %v649
        %v685 = vpack.c.b16 %v652, %v651
        %v686 = vpack.c.b16 %v654, %v653
        %719 = vmatprep.subr.bf16.mxu0 0
        %720 = vmatpush1.bf16.msra.mxu0 %v655
        %721 = vmatprep.subr.bf16.mxu0 0
        %722 = vmatpush1.bf16.msra.mxu0 %v656
        %723 = vmatprep.subr.bf16.mxu0 0
        %724 = vmatpush1.bf16.msra.mxu0 %v657
        %725 = vmatprep.subr.bf16.mxu0 0
        %726 = vmatpush1.bf16.msra.mxu0 %v658
        %727 = vmatprep.subr.bf16.mxu0 0
        %728 = vmatpush1.bf16.msra.mxu0 %v659
        %729 = vmatprep.subr.bf16.mxu0 0
        %730 = vmatpush1.bf16.msra.mxu0 %v660
        %731 = vmatprep.subr.bf16.mxu0 0
        %732 = vmatpush1.bf16.msra.mxu0 %v661
        %733 = vmatprep.subr.bf16.mxu0 0
        %734 = vmatpush1.bf16.msra.mxu0 %v662
        %735 = vmatprep.subr.bf16.mxu0 0
        %736 = vmatpush1.bf16.msra.mxu0 %v663
        %737 = vmatprep.subr.bf16.mxu0 0
        %738 = vmatpush1.bf16.msra.mxu0 %v664
        %739 = vmatprep.subr.bf16.mxu0 0
        %740 = vmatpush1.bf16.msra.mxu0 %v665
        %741 = vmatprep.subr.bf16.mxu0 0
        %742 = vmatpush1.bf16.msra.mxu0 %v666
        %743 = vmatprep.subr.bf16.mxu0 0
        %744 = vmatpush1.bf16.msra.mxu0 %v667
        %745 = vmatprep.subr.bf16.mxu0 0
        %746 = vmatpush1.bf16.msra.mxu0 %v668
        %747 = vmatprep.subr.bf16.mxu0 0
        %748 = vmatpush1.bf16.msra.mxu0 %v669
        %749 = vmatprep.subr.bf16.mxu0 0
        %750 = vmatpush1.bf16.msra.mxu0 %v670
        %751 = vmatprep.mubr.bf16.mxu0 %v464
        %752 = vmatmul.mubr.bf16.gmra.mrb[0].mxu0 %v463
        %v753 = vpop.f32.mrb[0].mxu0
        %v754 = vadd.f32 0.0, %v753
        %v755 = vpop.f32.mrb[0].mxu0
        %v756 = vpop.f32.mrb[0].mxu0
        %v757 = vadd.f32 0.0, %v756
        %v758 = vpop.f32.mrb[0].mxu0
        %759 = vmatprep.mubr.bf16.mxu0 %v468
        %760 = vmatmul.mubr.bf16.gmra.mrb[0].mxu0 %v467
        %v761 = vpop.f32.mrb[0].mxu0
        %v762 = vadd.f32 0.0, %v761
        %v763 = vpop.f32.mrb[0].mxu0
        %v764 = vpop.f32.mrb[0].mxu0
        %v765 = vadd.f32 0.0, %v764
        %v766 = vpop.f32.mrb[0].mxu0
        %767 = vmatprep.mubr.bf16.mxu0 %v472
        %768 = vmatmul.mubr.bf16.gmra.mrb[0].mxu0 %v471
        %v769 = vpop.f32.mrb[0].mxu0
        %v770 = vadd.f32 0.0, %v769
        %v771 = vpop.f32.mrb[0].mxu0
        %v772 = vpop.f32.mrb[0].mxu0
        %v773 = vadd.f32 0.0, %v772
        %v774 = vpop.f32.mrb[0].mxu0
        %775 = vmatprep.mubr.bf16.mxu0 %v476
        %776 = vmatmul.mubr.bf16.gmra.mrb[0].mxu0 %v475
        %v777 = vpop.f32.mrb[0].mxu0
        %v778 = vadd.f32 0.0, %v777
        %v779 = vpop.f32.mrb[0].mxu0
        %v780 = vpop.f32.mrb[0].mxu0
        %v781 = vadd.f32 0.0, %v780
        %v782 = vpop.f32.mrb[0].mxu0
        %783 = vmatprep.mubr.bf16.mxu0 %v480
        %784 = vmatmul.mubr.bf16.gmra.mrb[0].mxu0 %v479
        %v785 = vpop.f32.mrb[0].mxu0
        %v786 = vadd.f32 0.0, %v785
        %v787 = vpop.f32.mrb[0].mxu0
        %v788 = vpop.f32.mrb[0].mxu0
        %v789 = vadd.f32 0.0, %v788
        %v790 = vpop.f32.mrb[0].mxu0
        %791 = vmatprep.mubr.bf16.mxu0 %v484
        %792 = vmatmul.mubr.bf16.gmra.mrb[0].mxu0 %v483
        %v793 = vpop.f32.mrb[0].mxu0
        %v794 = vadd.f32 0.0, %v793
        %v795 = vpop.f32.mrb[0].mxu0
        %v796 = vpop.f32.mrb[0].mxu0
        %v797 = vadd.f32 0.0, %v796
        %v798 = vpop.f32.mrb[0].mxu0
        %799 = vmatprep.mubr.bf16.mxu0 %v488
        %800 = vmatmul.mubr.bf16.gmra.mrb[0].mxu0 %v487
        %v801 = vpop.f32.mrb[0].mxu0
        %v802 = vadd.f32 0.0, %v801
        %v803 = vpop.f32.mrb[0].mxu0
        %v804 = vpop.f32.mrb[0].mxu0
        %v805 = vadd.f32 0.0, %v804
        %v806 = vpop.f32.mrb[0].mxu0
        %807 = vmatprep.mubr.bf16.mxu0 %v492
        %808 = vmatmul.mubr.bf16.gmra.mrb[0].mxu0 %v491
        %v809 = vpop.f32.mrb[0].mxu0
        %v810 = vadd.f32 0.0, %v809
        %v811 = vpop.f32.mrb[0].mxu0
        %v812 = vpop.f32.mrb[0].mxu0
        %v813 = vadd.f32 0.0, %v812
        %v814 = vpop.f32.mrb[0].mxu0
        %815 = vmatprep.mubr.bf16.mxu0 %v496
        %816 = vmatmul.mubr.bf16.gmra.mrb[0].mxu0 %v495
        %v817 = vpop.f32.mrb[0].mxu0
        %v818 = vadd.f32 0.0, %v817
        %v819 = vpop.f32.mrb[0].mxu0
        %v820 = vpop.f32.mrb[0].mxu0
        %v821 = vadd.f32 0.0, %v820
        %v822 = vpop.f32.mrb[0].mxu0
        %823 = vmatprep.mubr.bf16.mxu0 %v500
        %824 = vmatmul.mubr.bf16.gmra.mrb[0].mxu0 %v499
        %v825 = vpop.f32.mrb[0].mxu0
        %v826 = vadd.f32 0.0, %v825
        %v827 = vpop.f32.mrb[0].mxu0
        %v828 = vpop.f32.mrb[0].mxu0
        %v829 = vadd.f32 0.0, %v828
        %v830 = vpop.f32.mrb[0].mxu0
        %831 = vmatprep.mubr.bf16.mxu0 %v504
        %832 = vmatmul.mubr.bf16.gmra.mrb[0].mxu0 %v503
        %v833 = vpop.f32.mrb[0].mxu0
        %v834 = vadd.f32 0.0, %v833
        %v835 = vpop.f32.mrb[0].mxu0
        %v836 = vpop.f32.mrb[0].mxu0
        %v837 = vadd.f32 0.0, %v836
        %v838 = vpop.f32.mrb[0].mxu0
        %839 = vmatprep.mubr.bf16.mxu0 %v508
        %840 = vmatmul.mubr.bf16.gmra.mrb[0].mxu0 %v507
        %v841 = vpop.f32.mrb[0].mxu0
        %v842 = vadd.f32 0.0, %v841
        %v843 = vpop.f32.mrb[0].mxu0
        %v844 = vpop.f32.mrb[0].mxu0
        %v845 = vadd.f32 0.0, %v844
        %v846 = vpop.f32.mrb[0].mxu0
        %847 = vmatprep.mubr.bf16.mxu0 %v512
        %848 = vmatmul.mubr.bf16.gmra.mrb[0].mxu0 %v511
        %v849 = vpop.f32.mrb[0].mxu0
        %v850 = vadd.f32 0.0, %v849
        %v851 = vpop.f32.mrb[0].mxu0
        %v852 = vpop.f32.mrb[0].mxu0
        %v853 = vadd.f32 0.0, %v852
        %v854 = vpop.f32.mrb[0].mxu0
        %855 = vmatprep.mubr.bf16.mxu0 %v516
        %856 = vmatmul.mubr.bf16.gmra.mrb[0].mxu0 %v515
        %v857 = vpop.f32.mrb[0].mxu0
        %v858 = vadd.f32 0.0, %v857
        %v859 = vpop.f32.mrb[0].mxu0
        %v860 = vpop.f32.mrb[0].mxu0
        %v861 = vadd.f32 0.0, %v860
        %v862 = vpop.f32.mrb[0].mxu0
        %863 = vmatprep.mubr.bf16.mxu0 %v520
        %864 = vmatmul.mubr.bf16.gmra.mrb[0].mxu0 %v519
        %v865 = vpop.f32.mrb[0].mxu0
        %v866 = vadd.f32 0.0, %v865
        %v867 = vpop.f32.mrb[0].mxu0
        %v868 = vpop.f32.mrb[0].mxu0
        %v869 = vadd.f32 0.0, %v868
        %v870 = vpop.f32.mrb[0].mxu0
        %871 = vmatprep.mubr.bf16.mxu0 %v524
        %872 = vmatmul.mubr.bf16.gmra.mrb[0].mxu0 %v523
        %v873 = vpop.f32.mrb[0].mxu0
        %v874 = vadd.f32 0.0, %v873
        %v875 = vpop.f32.mrb[0].mxu0
        %v876 = vpop.f32.mrb[0].mxu0
        %v877 = vadd.f32 0.0, %v876
        %v878 = vpop.f32.mrb[0].mxu0
        %879 = vdwg.mxu0
        %880 = vmatprep.subr.bf16.mxu0 0
        %881 = vmatpush1.bf16.msra.mxu0 %v671
        %882 = vmatprep.subr.bf16.mxu0 0
        %883 = vmatpush1.bf16.msra.mxu0 %v672
        %884 = vmatprep.subr.bf16.mxu0 0
        %885 = vmatpush1.bf16.msra.mxu0 %v673
        %886 = vmatprep.subr.bf16.mxu0 0
        %887 = vmatpush1.bf16.msra.mxu0 %v674
        %888 = vmatprep.subr.bf16.mxu0 0
        %889 = vmatpush1.bf16.msra.mxu0 %v675
        %890 = vmatprep.subr.bf16.mxu0 0
        %891 = vmatpush1.bf16.msra.mxu0 %v676
        %892 = vmatprep.subr.bf16.mxu0 0
        %893 = vmatpush1.bf16.msra.mxu0 %v677
        %894 = vmatprep.subr.bf16.mxu0 0
        %895 = vmatpush1.bf16.msra.mxu0 %v678
        %896 = vmatprep.subr.bf16.mxu0 0
        %897 = vmatpush1.bf16.msra.mxu0 %v679
        %898 = vmatprep.subr.bf16.mxu0 0
        %899 = vmatpush1.bf16.msra.mxu0 %v680
        %900 = vmatprep.subr.bf16.mxu0 0
        %901 = vmatpush1.bf16.msra.mxu0 %v681
        %902 = vmatprep.subr.bf16.mxu0 0
        %903 = vmatpush1.bf16.msra.mxu0 %v682
        %904 = vmatprep.subr.bf16.mxu0 0
        %905 = vmatpush1.bf16.msra.mxu0 %v683
        %906 = vmatprep.subr.bf16.mxu0 0
        %907 = vmatpush1.bf16.msra.mxu0 %v684
        %908 = vmatprep.subr.bf16.mxu0 0
        %909 = vmatpush1.bf16.msra.mxu0 %v685
        %910 = vmatprep.subr.bf16.mxu0 0
        %911 = vmatpush1.bf16.msra.mxu0 %v686
        %912 = vmatprep.mubr.bf16.mxu0 %v466
        %913 = vmatmul.mubr.bf16.gmra.mrb[0].mxu0 %v465
        %v914 = vpop.f32.mrb[0].mxu0
        %v915 = vadd.f32 %v754, %v914
        %v916 = vpop.f32.mrb[0].mxu0
        %v917 = vpop.f32.mrb[0].mxu0
        %v918 = vadd.f32 %v757, %v917
        %v919 = vpop.f32.mrb[0].mxu0
        %920 = vmatprep.mubr.bf16.mxu0 %v470
        %921 = vmatmul.mubr.bf16.gmra.mrb[0].mxu0 %v469
        %v922 = vpop.f32.mrb[0].mxu0
        %v923 = vadd.f32 %v762, %v922
        %v924 = vpop.f32.mrb[0].mxu0
        %v925 = vpop.f32.mrb[0].mxu0
        %v926 = vadd.f32 %v765, %v925
        %v927 = vpop.f32.mrb[0].mxu0
        %928 = vmatprep.mubr.bf16.mxu0 %v474
        %929 = vmatmul.mubr.bf16.gmra.mrb[0].mxu0 %v473
        %v930 = vpop.f32.mrb[0].mxu0
        %v931 = vadd.f32 %v770, %v930
        %v932 = vpop.f32.mrb[0].mxu0
        %v933 = vpop.f32.mrb[0].mxu0
        %v934 = vadd.f32 %v773, %v933
        %v935 = vpop.f32.mrb[0].mxu0
        %936 = vmatprep.mubr.bf16.mxu0 %v478
        %937 = vmatmul.mubr.bf16.gmra.mrb[0].mxu0 %v477
        %v938 = vpop.f32.mrb[0].mxu0
        %v939 = vadd.f32 %v778, %v938
        %v940 = vpop.f32.mrb[0].mxu0
        %v941 = vpop.f32.mrb[0].mxu0
        %v942 = vadd.f32 %v781, %v941
        %v943 = vpop.f32.mrb[0].mxu0
        %944 = vmatprep.mubr.bf16.mxu0 %v482
        %945 = vmatmul.mubr.bf16.gmra.mrb[0].mxu0 %v481
        %v946 = vpop.f32.mrb[0].mxu0
        %v947 = vadd.f32 %v786, %v946
        %v948 = vpop.f32.mrb[0].mxu0
        %v949 = vpop.f32.mrb[0].mxu0
        %v950 = vadd.f32 %v789, %v949
        %v951 = vpop.f32.mrb[0].mxu0
        %952 = vmatprep.mubr.bf16.mxu0 %v486
        %953 = vmatmul.mubr.bf16.gmra.mrb[0].mxu0 %v485
        %v954 = vpop.f32.mrb[0].mxu0
        %v955 = vadd.f32 %v794, %v954
        %v956 = vpop.f32.mrb[0].mxu0
        %v957 = vpop.f32.mrb[0].mxu0
        %v958 = vadd.f32 %v797, %v957
        %v959 = vpop.f32.mrb[0].mxu0
        %960 = vmatprep.mubr.bf16.mxu0 %v490
        %961 = vmatmul.mubr.bf16.gmra.mrb[0].mxu0 %v489
        %v962 = vpop.f32.mrb[0].mxu0
        %v963 = vadd.f32 %v802, %v962
        %v964 = vpop.f32.mrb[0].mxu0
        %v965 = vpop.f32.mrb[0].mxu0
        %v966 = vadd.f32 %v805, %v965
        %v967 = vpop.f32.mrb[0].mxu0
        %968 = vmatprep.mubr.bf16.mxu0 %v494
        %969 = vmatmul.mubr.bf16.gmra.mrb[0].mxu0 %v493
        %v970 = vpop.f32.mrb[0].mxu0
        %v971 = vadd.f32 %v810, %v970
        %v972 = vpop.f32.mrb[0].mxu0
        %v973 = vpop.f32.mrb[0].mxu0
        %v974 = vadd.f32 %v813, %v973
        %v975 = vpop.f32.mrb[0].mxu0
        %976 = vmatprep.mubr.bf16.mxu0 %v498
        %977 = vmatmul.mubr.bf16.gmra.mrb[0].mxu0 %v497
        %v978 = vpop.f32.mrb[0].mxu0
        %v979 = vadd.f32 %v818, %v978
        %v980 = vpop.f32.mrb[0].mxu0
        %v981 = vpop.f32.mrb[0].mxu0
        %v982 = vadd.f32 %v821, %v981
        %v983 = vpop.f32.mrb[0].mxu0
        %984 = vmatprep.mubr.bf16.mxu0 %v502
        %985 = vmatmul.mubr.bf16.gmra.mrb[0].mxu0 %v501
        %v986 = vpop.f32.mrb[0].mxu0
        %v987 = vadd.f32 %v826, %v986
        %v988 = vpop.f32.mrb[0].mxu0
        %v989 = vpop.f32.mrb[0].mxu0
        %v990 = vadd.f32 %v829, %v989
        %v991 = vpop.f32.mrb[0].mxu0
        %992 = vmatprep.mubr.bf16.mxu0 %v506
        %993 = vmatmul.mubr.bf16.gmra.mrb[0].mxu0 %v505
        %v994 = vpop.f32.mrb[0].mxu0
        %v995 = vadd.f32 %v834, %v994
        %v996 = vpop.f32.mrb[0].mxu0
        %v997 = vpop.f32.mrb[0].mxu0
        %v998 = vadd.f32 %v837, %v997
        %v999 = vpop.f32.mrb[0].mxu0
        %1000 = vmatprep.mubr.bf16.mxu0 %v510
        %1001 = vmatmul.mubr.bf16.gmra.mrb[0].mxu0 %v509
        %v1002 = vpop.f32.mrb[0].mxu0
        %v1003 = vadd.f32 %v842, %v1002
        %v1004 = vpop.f32.mrb[0].mxu0
        %v1005 = vpop.f32.mrb[0].mxu0
        %v1006 = vadd.f32 %v845, %v1005
        %v1007 = vpop.f32.mrb[0].mxu0
        %1008 = vmatprep.mubr.bf16.mxu0 %v514
        %1009 = vmatmul.mubr.bf16.gmra.mrb[0].mxu0 %v513
        %v1010 = vpop.f32.mrb[0].mxu0
        %v1011 = vadd.f32 %v850, %v1010
        %v1012 = vpop.f32.mrb[0].mxu0
        %v1013 = vpop.f32.mrb[0].mxu0
        %v1014 = vadd.f32 %v853, %v1013
        %v1015 = vpop.f32.mrb[0].mxu0
        %1016 = vmatprep.mubr.bf16.mxu0 %v518
        %1017 = vmatmul.mubr.bf16.gmra.mrb[0].mxu0 %v517
        %v1018 = vpop.f32.mrb[0].mxu0
        %v1019 = vadd.f32 %v858, %v1018
        %v1020 = vpop.f32.mrb[0].mxu0
        %v1021 = vpop.f32.mrb[0].mxu0
        %v1022 = vadd.f32 %v861, %v1021
        %v1023 = vpop.f32.mrb[0].mxu0
        %1024 = vmatprep.mubr.bf16.mxu0 %v522
        %1025 = vmatmul.mubr.bf16.gmra.mrb[0].mxu0 %v521
        %v1026 = vpop.f32.mrb[0].mxu0
        %v1027 = vadd.f32 %v866, %v1026
        %v1028 = vpop.f32.mrb[0].mxu0
        %v1029 = vpop.f32.mrb[0].mxu0
        %v1030 = vadd.f32 %v869, %v1029
        %v1031 = vpop.f32.mrb[0].mxu0
        %1032 = vmatprep.mubr.bf16.mxu0 %v526
        %1033 = vmatmul.mubr.bf16.gmra.mrb[0].mxu0 %v525
        %v1034 = vpop.f32.mrb[0].mxu0
        %v1035 = vadd.f32 %v874, %v1034
        %v1036 = vpop.f32.mrb[0].mxu0
        %v1037 = vpop.f32.mrb[0].mxu0
        %v1038 = vadd.f32 %v877, %v1037
        %v1039 = vpop.f32.mrb[0].mxu0
        %1040 = vdwg.mxu0
        %v1041 = vadd.f32 %v303, %v915
        %v1042 = vadd.f32 %v304, %v918
        %v1043 = vadd.f32 %v305, %v923
        %v1044 = vadd.f32 %v306, %v926
        %v1045 = vadd.f32 %v307, %v931
        %v1046 = vadd.f32 %v308, %v934
        %v1047 = vadd.f32 %v309, %v939
        %v1048 = vadd.f32 %v310, %v942
        %v1049 = vadd.f32 %v311, %v947
        %v1050 = vadd.f32 %v312, %v950
        %v1051 = vadd.f32 %v313, %v955
        %v1052 = vadd.f32 %v314, %v958
        %v1053 = vadd.f32 %v315, %v963
        %v1054 = vadd.f32 %v316, %v966
        %v1055 = vadd.f32 %v317, %v971
        %v1056 = vadd.f32 %v318, %v974
        %v1057 = vadd.f32 %v319, %v979
        %v1058 = vadd.f32 %v320, %v982
        %v1059 = vadd.f32 %v321, %v987
        %v1060 = vadd.f32 %v322, %v990
        %v1061 = vadd.f32 %v323, %v995
        %v1062 = vadd.f32 %v324, %v998
        %v1063 = vadd.f32 %v325, %v1003
        %v1064 = vadd.f32 %v326, %v1006
        %v1065 = vadd.f32 %v327, %v1011
        %v1066 = vadd.f32 %v328, %v1014
        %v1067 = vadd.f32 %v329, %v1019
        %v1068 = vadd.f32 %v330, %v1022
        %v1069 = vadd.f32 %v331, %v1027
        %v1070 = vadd.f32 %v332, %v1030
        %v1071 = vadd.f32 %v333, %v1035
        %v1072 = vadd.f32 %v334, %v1038
        %1073 = vst [vmem:[#allocation2] sm:$0xff] %v1041
        %1074 = vst [vmem:[#allocation2 + $0x8] sm:$0xff] %v1042
        %1075 = vst [vmem:[#allocation2 + $0x10] sm:$0xff] %v1043
        %1076 = vst [vmem:[#allocation2 + $0x18] sm:$0xff] %v1044
        %1077 = vst [vmem:[#allocation2 + $0x20] sm:$0xff] %v1045
        %1078 = vst [vmem:[#allocation2 + $0x28] sm:$0xff] %v1046
        %1079 = vst [vmem:[#allocation2 + $0x30] sm:$0xff] %v1047
        %1080 = vst [vmem:[#allocation2 + $0x38] sm:$0xff] %v1048
        %1081 = vst [vmem:[#allocation2 + $0x40] sm:$0xff] %v1049
        %1082 = vst [vmem:[#allocation2 + $0x48] sm:$0xff] %v1050
        %1083 = vst [vmem:[#allocation2 + $0x50] sm:$0xff] %v1051
        %1084 = vst [vmem:[#allocation2 + $0x58] sm:$0xff] %v1052
        %1085 = vst [vmem:[#allocation2 + $0x60] sm:$0xff] %v1053
        %1086 = vst [vmem:[#allocation2 + $0x68] sm:$0xff] %v1054
        %1087 = vst [vmem:[#allocation2 + $0x70] sm:$0xff] %v1055
        %1088 = vst [vmem:[#allocation2 + $0x78] sm:$0xff] %v1056
        %1089 = vst [vmem:[#allocation2 + $0x80] sm:$0xff] %v1057
        %1090 = vst [vmem:[#allocation2 + $0x88] sm:$0xff] %v1058
        %1091 = vst [vmem:[#allocation2 + $0x90] sm:$0xff] %v1059
        %1092 = vst [vmem:[#allocation2 + $0x98] sm:$0xff] %v1060
        %1093 = vst [vmem:[#allocation2 + $0xa0] sm:$0xff] %v1061
        %1094 = vst [vmem:[#allocation2 + $0xa8] sm:$0xff] %v1062
        %1095 = vst [vmem:[#allocation2 + $0xb0] sm:$0xff] %v1063
        %1096 = vst [vmem:[#allocation2 + $0xb8] sm:$0xff] %v1064
        %1097 = vst [vmem:[#allocation2 + $0xc0] sm:$0xff] %v1065
        %1098 = vst [vmem:[#allocation2 + $0xc8] sm:$0xff] %v1066
        %1099 = vst [vmem:[#allocation2 + $0xd0] sm:$0xff] %v1067
        %1100 = vst [vmem:[#allocation2 + $0xd8] sm:$0xff] %v1068
        %1101 = vst [vmem:[#allocation2 + $0xe0] sm:$0xff] %v1069
        %1102 = vst [vmem:[#allocation2 + $0xe8] sm:$0xff] %v1070
        %1103 = vst [vmem:[#allocation2 + $0xf0] sm:$0xff] %v1071
        %1104 = vst [vmem:[#allocation2 + $0xf8] sm:$0xff] %v1072
        // Predicated region
        $region41: #{tpu_custom_call.1} parent=27 // pred_check
          %p1105 = pneg %p198
        $region42: #{tpu_custom_call.1} parent=27 // pred_check_branch
          %1107 = sbr.rel (%p1105) target = $region44
        $region43: #{tpu_custom_call.1} parent=27 // pred_region
          %v1108 = vld [vmem:[#allocation2] sm:$0xff]
          %v1109 = vld [vmem:[#allocation2 + $0x8] sm:$0xff]
          %v1110 = vld [vmem:[#allocation2 + $0x10] sm:$0xff]
          %v1111 = vld [vmem:[#allocation2 + $0x18] sm:$0xff]
          %v1112 = vld [vmem:[#allocation2 + $0x20] sm:$0xff]
          %v1113 = vld [vmem:[#allocation2 + $0x28] sm:$0xff]
          %v1114 = vld [vmem:[#allocation2 + $0x30] sm:$0xff]
          %v1115 = vld [vmem:[#allocation2 + $0x38] sm:$0xff]
          %v1116 = vld [vmem:[#allocation2 + $0x40] sm:$0xff]
          %v1117 = vld [vmem:[#allocation2 + $0x48] sm:$0xff]
          %v1118 = vld [vmem:[#allocation2 + $0x50] sm:$0xff]
          %v1119 = vld [vmem:[#allocation2 + $0x58] sm:$0xff]
          %v1120 = vld [vmem:[#allocation2 + $0x60] sm:$0xff]
          %v1121 = vld [vmem:[#allocation2 + $0x68] sm:$0xff]
          %v1122 = vld [vmem:[#allocation2 + $0x70] sm:$0xff]
          %v1123 = vld [vmem:[#allocation2 + $0x78] sm:$0xff]
          %v1124 = vld [vmem:[#allocation2 + $0x80] sm:$0xff]
          %v1125 = vld [vmem:[#allocation2 + $0x88] sm:$0xff]
          %v1126 = vld [vmem:[#allocation2 + $0x90] sm:$0xff]
          %v1127 = vld [vmem:[#allocation2 + $0x98] sm:$0xff]
          %v1128 = vld [vmem:[#allocation2 + $0xa0] sm:$0xff]
          %v1129 = vld [vmem:[#allocation2 + $0xa8] sm:$0xff]
          %v1130 = vld [vmem:[#allocation2 + $0xb0] sm:$0xff]
          %v1131 = vld [vmem:[#allocation2 + $0xb8] sm:$0xff]
          %v1132 = vld [vmem:[#allocation2 + $0xc0] sm:$0xff]
          %v1133 = vld [vmem:[#allocation2 + $0xc8] sm:$0xff]
          %v1134 = vld [vmem:[#allocation2 + $0xd0] sm:$0xff]
          %v1135 = vld [vmem:[#allocation2 + $0xd8] sm:$0xff]
          %v1136 = vld [vmem:[#allocation2 + $0xe0] sm:$0xff]
          %v1137 = vld [vmem:[#allocation2 + $0xe8] sm:$0xff]
          %v1138 = vld [vmem:[#allocation2 + $0xf0] sm:$0xff]
          %v1139 = vld [vmem:[#allocation2 + $0xf8] sm:$0xff]
          %1140 = vst [vmem:[%s193] sm:$0xff] %v1108
          %1141 = vst [vmem:[%s193 + $0x8] sm:$0xff] %v1109
          %1142 = vst [vmem:[%s193 + $0x10] sm:$0xff] %v1110
          %1143 = vst [vmem:[%s193 + $0x18] sm:$0xff] %v1111
          %1144 = vst [vmem:[%s193 + $0x20] sm:$0xff] %v1112
          %1145 = vst [vmem:[%s193 + $0x28] sm:$0xff] %v1113
          %1146 = vst [vmem:[%s193 + $0x30] sm:$0xff] %v1114
          %1147 = vst [vmem:[%s193 + $0x38] sm:$0xff] %v1115
          %1148 = vst [vmem:[%s193 + $0x40] sm:$0xff] %v1116
          %1149 = vst [vmem:[%s193 + $0x48] sm:$0xff] %v1117
          %1150 = vst [vmem:[%s193 + $0x50] sm:$0xff] %v1118
          %1151 = vst [vmem:[%s193 + $0x58] sm:$0xff] %v1119
          %1152 = vst [vmem:[%s193 + $0x60] sm:$0xff] %v1120
          %1153 = vst [vmem:[%s193 + $0x68] sm:$0xff] %v1121
          %1154 = vst [vmem:[%s193 + $0x70] sm:$0xff] %v1122
          %1155 = vst [vmem:[%s193 + $0x78] sm:$0xff] %v1123
          %1156 = vst [vmem:[%s193 + $0x80] sm:$0xff] %v1124
          %1157 = vst [vmem:[%s193 + $0x88] sm:$0xff] %v1125
          %1158 = vst [vmem:[%s193 + $0x90] sm:$0xff] %v1126
          %1159 = vst [vmem:[%s193 + $0x98] sm:$0xff] %v1127
          %1160 = vst [vmem:[%s193 + $0xa0] sm:$0xff] %v1128
          %1161 = vst [vmem:[%s193 + $0xa8] sm:$0xff] %v1129
          %1162 = vst [vmem:[%s193 + $0xb0] sm:$0xff] %v1130
          %1163 = vst [vmem:[%s193 + $0xb8] sm:$0xff] %v1131
          %1164 = vst [vmem:[%s193 + $0xc0] sm:$0xff] %v1132
          %1165 = vst [vmem:[%s193 + $0xc8] sm:$0xff] %v1133
          %1166 = vst [vmem:[%s193 + $0xd0] sm:$0xff] %v1134
          %1167 = vst [vmem:[%s193 + $0xd8] sm:$0xff] %v1135
          %1168 = vst [vmem:[%s193 + $0xe0] sm:$0xff] %v1136
          %1169 = vst [vmem:[%s193 + $0xe8] sm:$0xff] %v1137
          %1170 = vst [vmem:[%s193 + $0xf0] sm:$0xff] %v1138
          %1171 = vst [vmem:[%s193 + $0xf8] sm:$0xff] %v1139
        $region44: #{tpu_custom_call.1} parent=27 // pred_fallthru
          _
        %s1172 = sand.u32 %s89, 1
        %s1173 = scalar_lea.sflag [#allocation5], %s1172
        %s1174 = sand.u32 %s89, 1
        %s1175 = smul.addr %s1174, 256
        %s1176 = scalar_lea.vmem [#allocation8], %s1175
        // Predicated region
        $region45: #{tpu_custom_call.1} parent=27 // pred_check
          %p1177 = pneg %p99
        $region46: #{tpu_custom_call.1} parent=27 // pred_check_branch
          %1179 = sbr.rel (%p1177) target = $region48
        $region47: #{tpu_custom_call.1} parent=27 // pred_region
          %s1180 = smul.u32 32, %s24
          %s1182 = ssub.s32 4096, 4096
          %1183 = vsyncadd %s1173, %s1182
          %s1184 = smul.addr %s1180, 128
          %s1185 = scalar_lea.hbm %s2, %s1184
          %s1186 = sshll.u32 %s1176, 4
          %s1187 = int_to_ptr.vmem [resolvable:$true] %s1186
          %1192 = dma.vmem_to_hbm [thread:$0]  %s1187, 4096, %s1185, %s1173, 128, 128, 8
        $region48: #{tpu_custom_call.1} parent=27 // pred_fallthru
          _
      $region28: #{tpu_custom_call.1} parent=5 // pred_fallthru
        _
      %p1193 = scmp.le.s32.totalorder 2, %s15
      // Predicated region
      $region49: #{tpu_custom_call.1} parent=5 // pred_check
        %p1194 = pneg %p1193
      $region50: #{tpu_custom_call.1} parent=5 // pred_check_branch
        %1196 = sbr.rel (%p1194) target = $region52
      $region51: #{tpu_custom_call.1} parent=5 // pred_region
        %s1197 = ssub.s32 %s15, 2
        // Predicated region
        $region53: #{tpu_custom_call.1} parent=51 // pred_check
          %p1198 = pneg %p105
        $region54: #{tpu_custom_call.1} parent=51 // pred_check_branch
          %1200 = sbr.rel (%p1198) target = $region56
        $region55: #{tpu_custom_call.1} parent=51 // pred_region
          %s1201 = sand.u32 %s90, 1
          %s1202 = scalar_lea.sflag [#allocation5], %s1201
          %s1203 = sand.u32 %s90, 1
          %s1204 = smul.addr %s1203, 256
          %s1205 = scalar_lea.vmem [#allocation8], %s1204
          %1206 = dma.done %s1202, 4096
        $region56: #{tpu_custom_call.1} parent=51 // pred_fallthru
          _
      $region52: #{tpu_custom_call.1} parent=5 // pred_fallthru
        _
    $region6: #{tpu_custom_call.1} parent=1 // loop_footer
      %s19 = sadd.s32 1, %s15
    $region7: #{tpu_custom_call.1} parent=1 // loop_footer_branch
      %14 = sbr.rel target = $region3
    $region8: #{tpu_custom_call.1} parent=1 // loop_exit
      _
    %1207 = vsyncpa [#allocation4], 1
    %s1208 = scalar_lea.sflag [#allocation4], 1
    %1209 = vsyncpa %s1208, 1
    %1210 = vsyncpa [#allocation7], 1
    %s1211 = scalar_lea.sflag [#allocation7], 1
    %1212 = vsyncpa %s1211, 1
    %1213 = vsyncpa [#allocation5], 1
    %s1214 = scalar_lea.sflag [#allocation5], 1
    %1215 = vsyncpa %s1214, 1

</llo_original>
